<compile_context>
chip_gen: v5e
topology: v5e:2x2
jax: 0.10.0
libtpu: 0.0.40
codegen_flags: <defaults>
</compile_context>

<pallas_src>
import jax
import jax.numpy as jnp
from jax.experimental import pallas as pl
from jax.experimental.pallas import tpu as pltpu


def _sft1x1_kernel(x_ref, w_ref, b_ref, o_ref):
    # x_ref: (1, C_in, TS)   lane-dense spatial tile
    # w_ref: (C_out, C_in)   tiny, VMEM-resident (constant index_map)
    # b_ref: (C_out, 1)
    # o_ref: (1, C_out, TS)  lane-dense output tile (NCHW-flattened)
    x = x_ref[0].astype(jnp.float32)        # (C_in, TS)
    w = w_ref[...].astype(jnp.float32)      # (C_out, C_in)
    c_in = x.shape[0]

    # Unrolled VPU FMA over input channels: outer-product broadcasts
    # (C_out,1) * (1,TS) -> (C_out,TS), accumulated in f32.
    acc = w[:, 0:1] * x[0:1, :]
    for ci in range(1, c_in):
        acc = acc + w[:, ci:ci + 1] * x[ci:ci + 1, :]
    acc = acc + b_ref[...].astype(jnp.float32)      # bias broadcast over lanes

    # LeakyReLU, PyTorch default negative_slope = 0.01
    out = jnp.where(acc >= 0.0, acc, 0.01 * acc)
    o_ref[0] = out.astype(o_ref.dtype)


def _choose_spatial_tile(hw, c_in, c_out, elem_bytes=4,
                         vmem_budget_bytes=8 * 1024 * 1024):
    """Largest lane tile (multiple of 128) whose double-buffered in+out
    blocks fit a conservative VMEM budget (safe on v5e/v6e 128MiB and
    v7x 64MiB without touching vmem_limit_bytes)."""
    max_ts = vmem_budget_bytes // (2 * (c_in + c_out) * elem_bytes)
    max_ts = max(128, (max_ts // 128) * 128)
    if hw <= max_ts:
        # Full spatial extent in one block: block dim == array dim, always legal.
        return hw
    return max_ts


def sft_layer1_forward(x_nchw, weight, bias, *, tile_hw=None):
    """x_nchw: (N, C_in, H, W); weight: (C_out, C_in, 1, 1); bias: (C_out,)."""
    N, C_in, H, W = x_nchw.shape
    C_out = weight.shape[0]
    HW = H * W

    # Free reshapes only (no transposes, no extra HBM passes).
    x3 = x_nchw.reshape(N, C_in, HW)
    w_mat = weight.reshape(C_out, C_in)
    b_col = bias.reshape(C_out, 1)

    if tile_hw is None:
        tile_hw = _choose_spatial_tile(HW, C_in, C_out)

    grid = (N, pl.cdiv(HW, tile_hw))

    out3 = pl.pallas_call(
        _sft1x1_kernel,
        out_shape=jax.ShapeDtypeStruct((N, C_out, HW), x_nchw.dtype),
        grid_spec=pltpu.PrefetchScalarGridSpec(
            num_scalar_prefetch=0,
            grid=grid,
            in_specs=[
                pl.BlockSpec((1, C_in, tile_hw), lambda n, s: (n, 0, s)),
                pl.BlockSpec((C_out, C_in), lambda n, s: (0, 0)),
                pl.BlockSpec((C_out, 1), lambda n, s: (0, 0)),
            ],
            out_specs=pl.BlockSpec((1, C_out, tile_hw), lambda n, s: (n, 0, s)),
        ),
        compiler_params=pltpu.CompilerParams(
            dimension_semantics=("parallel", "parallel"),
        ),
    )(x3, w_mat, b_col)

    # Free reshape back to NCHW (already channel-major).
    return out3.reshape(N, C_out, H, W)


if __name__ == "__main__":
    key = jax.random.PRNGKey(0)
    k_x, k_w, k_b = jax.random.split(key, 3)

    N, C_in, C_out, Hs, Ws = 2, 4, 8, 16, 16
    x = jax.random.normal(k_x, (N, C_in, Hs, Ws), dtype=jnp.float32)
    # Deterministic synthetic parameters mimicking nn.Conv2d(in, out, 1)
    weight = jax.random.normal(k_w, (C_out, C_in, 1, 1), dtype=jnp.float32) * 0.1
    bias = jax.random.normal(k_b, (C_out,), dtype=jnp.float32) * 0.1

    out = sft_layer1_forward(x, weight, bias)
    jax.block_until_ready(out)

    # Reference in plain JAX (1x1 conv == per-pixel channel matmul)
    ref = jnp.einsum("nchw,oc->nohw", x, weight.reshape(C_out, C_in)) \
        + bias[None, :, None, None]
    ref = jnp.where(ref >= 0.0, ref, 0.01 * ref)

    assert out.shape == (N, C_out, Hs, Ws)
    assert jnp.allclose(out, ref, atol=1e-5, rtol=1e-5)

    print("KERNEL_OK")
</pallas_src>

<mosaic_0001>
module attributes {stable_mosaic.version = 11 : i64} {
  func.func @_sft1x1_kernel(%arg0: i32, %arg1: i32, %arg2: memref<1x4x256xf32, #tpu.memory_space<vmem>>, %arg3: memref<8x4xf32, #tpu.memory_space<vmem>>, %arg4: memref<8x1xf32, #tpu.memory_space<vmem>>, %arg5: memref<1x8x256xf32, #tpu.memory_space<vmem>>) attributes {dimension_semantics = [#tpu.dimension_semantics<parallel>, #tpu.dimension_semantics<parallel>], iteration_bounds = array<i64: 2, 1>, scalar_prefetch = 0 : i64, scratch_operands = 0 : i64, tpu.core_type = #tpu.core_type<tc>, window_params = [{transform_indices = @transform_0, window_bounds = array<i64: 1, 4, 256>}, {pipeline_mode = #tpu.pipeline_mode<synchronous>, transform_indices = @transform_1, window_bounds = array<i64: 8, 4>}, {pipeline_mode = #tpu.pipeline_mode<synchronous>, transform_indices = @transform_2, window_bounds = array<i64: 8, 1>}, {transform_indices = @transform_3, window_bounds = array<i64: 1, 8, 256>}]} {
    %c0 = arith.constant 0 : index
    %c0_0 = arith.constant 0 : index
    %c0_1 = arith.constant 0 : index
    %0 = vector.load %arg2[%c0, %c0_0, %c0_1] : memref<1x4x256xf32, #tpu.memory_space<vmem>>, vector<1x4x256xf32>
    %1 = vector.shape_cast %0 : vector<1x4x256xf32> to vector<4x256xf32>
    %c0_2 = arith.constant 0 : index
    %c0_3 = arith.constant 0 : index
    %2 = vector.load %arg3[%c0_2, %c0_3] : memref<8x4xf32, #tpu.memory_space<vmem>>, vector<8x4xf32>
    %3 = vector.extract_strided_slice %2 {offsets = [0, 0], sizes = [8, 1], strides = [1, 1]} : vector<8x4xf32> to vector<8x1xf32>
    %4 = vector.extract_strided_slice %1 {offsets = [0, 0], sizes = [1, 256], strides = [1, 1]} : vector<4x256xf32> to vector<1x256xf32>
    %5 = vector.broadcast %3 : vector<8x1xf32> to vector<8x256xf32>
    %6 = vector.broadcast %4 : vector<1x256xf32> to vector<8x256xf32>
    %7 = arith.mulf %5, %6 : vector<8x256xf32>
    %8 = vector.extract_strided_slice %2 {offsets = [0, 1], sizes = [8, 1], strides = [1, 1]} : vector<8x4xf32> to vector<8x1xf32>
    %9 = vector.extract_strided_slice %1 {offsets = [1, 0], sizes = [1, 256], strides = [1, 1]} : vector<4x256xf32> to vector<1x256xf32>
    %10 = vector.broadcast %8 : vector<8x1xf32> to vector<8x256xf32>
    %11 = vector.broadcast %9 : vector<1x256xf32> to vector<8x256xf32>
    %12 = arith.mulf %10, %11 : vector<8x256xf32>
    %13 = arith.addf %7, %12 : vector<8x256xf32>
    %14 = vector.extract_strided_slice %2 {offsets = [0, 2], sizes = [8, 1], strides = [1, 1]} : vector<8x4xf32> to vector<8x1xf32>
    %15 = vector.extract_strided_slice %1 {offsets = [2, 0], sizes = [1, 256], strides = [1, 1]} : vector<4x256xf32> to vector<1x256xf32>
    %16 = vector.broadcast %14 : vector<8x1xf32> to vector<8x256xf32>
    %17 = vector.broadcast %15 : vector<1x256xf32> to vector<8x256xf32>
    %18 = arith.mulf %16, %17 : vector<8x256xf32>
    %19 = arith.addf %13, %18 : vector<8x256xf32>
    %20 = vector.extract_strided_slice %2 {offsets = [0, 3], sizes = [8, 1], strides = [1, 1]} : vector<8x4xf32> to vector<8x1xf32>
    %21 = vector.extract_strided_slice %1 {offsets = [3, 0], sizes = [1, 256], strides = [1, 1]} : vector<4x256xf32> to vector<1x256xf32>
    %22 = vector.broadcast %20 : vector<8x1xf32> to vector<8x256xf32>
    %23 = vector.broadcast %21 : vector<1x256xf32> to vector<8x256xf32>
    %24 = arith.mulf %22, %23 : vector<8x256xf32>
    %25 = arith.addf %19, %24 : vector<8x256xf32>
    %c0_4 = arith.constant 0 : index
    %c0_5 = arith.constant 0 : index
    %26 = vector.load %arg4[%c0_4, %c0_5] : memref<8x1xf32, #tpu.memory_space<vmem>>, vector<8x1xf32>
    %27 = vector.broadcast %26 : vector<8x1xf32> to vector<8x256xf32>
    %28 = arith.addf %25, %27 : vector<8x256xf32>
    %cst = arith.constant 0.000000e+00 : f32
    %29 = vector.broadcast %cst : f32 to vector<8x256xf32>
    %30 = arith.cmpf oge, %28, %29 : vector<8x256xf32>
    %cst_6 = arith.constant 0.00999999977 : f32
    %31 = vector.broadcast %cst_6 : f32 to vector<8x256xf32>
    %32 = arith.mulf %31, %28 : vector<8x256xf32>
    %33 = arith.select %30, %28, %32 : vector<8x256xi1>, vector<8x256xf32>
    %c0_7 = arith.constant 0 : index
    %c0_8 = arith.constant 0 : index
    %c0_9 = arith.constant 0 : index
    %34 = vector.load %arg5[%c0_7, %c0_8, %c0_9] : memref<1x8x256xf32, #tpu.memory_space<vmem>>, vector<1x8x256xf32>
    %35 = vector.shape_cast %34 : vector<1x8x256xf32> to vector<8x256xf32>
    %36 = vector.shape_cast %33 : vector<8x256xf32> to vector<1x8x256xf32>
    tpu.vector_store %arg5[%c0_7, %c0_8, %c0_9], %36 {strides = array<i32>} : memref<1x8x256xf32, #tpu.memory_space<vmem>>, vector<1x8x256xf32>,
    return
  }
  func.func @transform_0(%arg0: i32, %arg1: i32) -> (i32, i32, i32) {
    %c0_i32 = arith.constant 0 : i32
    %c0_i32_0 = arith.constant 0 : i32
    return %arg0, %c0_i32, %arg1 : i32, i32, i32
  }
  func.func @transform_1(%arg0: i32, %arg1: i32) -> (i32, i32) {
    %c0_i32 = arith.constant 0 : i32
    %c0_i32_0 = arith.constant 0 : i32
    %c0_i32_1 = arith.constant 0 : i32
    return %c0_i32, %c0_i32_0 : i32, i32
  }
  func.func @transform_2(%arg0: i32, %arg1: i32) -> (i32, i32) {
    %c0_i32 = arith.constant 0 : i32
    %c0_i32_0 = arith.constant 0 : i32
    %c0_i32_1 = arith.constant 0 : i32
    return %c0_i32, %c0_i32_0 : i32, i32
  }
  func.func @transform_3(%arg0: i32, %arg1: i32) -> (i32, i32, i32) {
    %c0_i32 = arith.constant 0 : i32
    %c0_i32_0 = arith.constant 0 : i32
    return %arg0, %c0_i32, %arg1 : i32, i32, i32
  }
}

</mosaic_0001>

<llo_original>
// kernel: tpu_custom_call.1
$region0: #{tpu_custom_call.1}
  #allocation0 [shape = 'u32[]', space=smem, size = 0x4, offset = 0x4, fixed_abs, tag = 'smem constant byte address 0x4 - core index']
  #allocation1 [shape = 'u32[72,128]{1,0:T(1,128)}', space=vmem, size = 0x9000, scoped, tag = 'internal scratch']
  %s0 = inlined_call_operand.vmem [shape: f32[2,4,256], index: 0, kind: input, shape index: {}]
  %s1 = inlined_call_operand.vmem [shape: f32[8,4], index: 1, kind: input, shape index: {}]
  %s2 = inlined_call_operand.vmem [shape: f32[8,1], index: 2, kind: input, shape index: {}]
  %s3 = inlined_call_operand.hbm [shape: f32[2,8,256], index: 3, kind: output, shape index: {}]
  %s4 = sld [smem:[#allocation0]]
  $region45: #{tpu_custom_call.1} parent=0
    _
  %s6 = ssub.s32 1, %s4
  %s7 = scalar_select 0, %s6, %s4
  $region1: #{tpu_custom_call.1} parent=0
    #allocation2 [shape = 'u8[16384]{0}', space=vmem, size = 0x4000, scoped, tag = 'output window, operand 0']
    #allocation3 [shape = 's32[2]{0}', space=sflag, size = 0x8, scoped, tag = 'scoped memory for tpu_custom_call.1']
    %8 = vsyncpa [#allocation3], 0
    %s9 = scalar_lea.sflag [#allocation3], 1
    %10 = vsyncpa %s9, 0
    loop: start=0, step=1, limit=4
    $region2: #{tpu_custom_call.1} parent=1 // loop_pre_header
      _
    $region3: #{tpu_custom_call.1} parent=1 // loop_header
      %s12 = sphi 0, %s16
      %p13 = scmp.ge.s32.totalorder %s12, 4
      %s19 = sphi 0, %s31
      %s20 = sphi 0, %s27
      %s21 = sphi 0, %s19
      %s22 = sphi 0, %s20
      %s23 = sphi 0, %s21
      %s24 = sphi 0, %s22
      %s36 = sphi 0, %s38
      %s39 = sphi 0, %s36
      %s40 = sphi 0, %s39
      %s56 = sphi 0, %s40
      %s60 = sphi 0, %s60
      %s62 = sphi 0, %s60
      %s63 = sphi 0, %s62
      %s77 = sphi 0, %s63
      %s81 = sphi 0, %s81
      %s83 = sphi 0, %s81
      %s84 = sphi 0, %s83
      %s98 = sphi 0, %s84
      %s106 = sphi 0, %s108
      %s109 = sphi 0, %s106
      %s110 = sphi 0, %s109
      %s126 = sphi 0, %s110
    $region4: #{tpu_custom_call.1} parent=1 // loop_header_branch
      %15 = sbr.rel (%p13) target = $region8
    $region5: #{tpu_custom_call.1} parent=1 // loop_body
      %s17 = ssub.s32 %s12, 1
      %s18 = ssub.s32 %s12, 2
      %s25 = sadd.s32 1, %s20
      %p26 = scmp.ge.s32.totalorder %s25, 1
      %s27 = scalar_select %p26, 0, %s25
      %s28 = sadd.s32 1, %s19
      %s29 = scalar_select %p26, %s28, %s19
      %p30 = scmp.ge.s32.totalorder %s29, 2
      %s31 = scalar_select %p30, 0, %s29
      %s32 = ssub.s32 %s19, %s31
      %s33 = ssub.s32 %s20, %s27
      %s34 = sor.u32 %s32, %s33
      %p35 = scmp.eq.s32.totalorder %s34, 0
      %s37 = sadd.s32 %s36, 1
      %s38 = scalar_select %p35, %s36, %s37
      %p41 = pneg %p35
      %p42 = scmp.eq.s32.totalorder %s12, 1
      %p43 = por %p41, %p42
      %p44 = scmp.ne.s32.totalorder %s36, %s39
      %p45 = scmp.eq.s32.totalorder %s12, 0
      %p46 = por %p44, %p45
      %p47 = scmp.ne.s32.totalorder %s36, %s39
      %p48 = scmp.eq.s32.totalorder %s17, 1
      %p49 = por %p47, %p48
      %p50 = scmp.ne.s32.totalorder %s39, %s40
      %p51 = scmp.eq.s32.totalorder %s17, 0
      %p52 = por %p50, %p51
      %p53 = scmp.ne.s32.totalorder %s39, %s40
      %p54 = scmp.eq.s32.totalorder %s18, 1
      %p55 = por %p53, %p54
      %p57 = scmp.ne.s32.totalorder %s40, %s56
      %p58 = scmp.eq.s32.totalorder %s18, 0
      %p59 = por %p57, %p58
      %s61 = sadd.s32 %s60, 1
      %p64 = scmp.eq.s32.totalorder %s12, 1
      %p65 = scmp.ne.s32.totalorder %s60, %s62
      %p66 = scmp.eq.s32.totalorder %s12, 0
      %p67 = por %p65, %p66
      %p68 = scmp.ne.s32.totalorder %s60, %s62
      %p69 = scmp.eq.s32.totalorder %s17, 1
      %p70 = por %p68, %p69
      %p71 = scmp.ne.s32.totalorder %s62, %s63
      %p72 = scmp.eq.s32.totalorder %s17, 0
      %p73 = por %p71, %p72
      %p74 = scmp.ne.s32.totalorder %s62, %s63
      %p75 = scmp.eq.s32.totalorder %s18, 1
      %p76 = por %p74, %p75
      %p78 = scmp.ne.s32.totalorder %s63, %s77
      %p79 = scmp.eq.s32.totalorder %s18, 0
      %p80 = por %p78, %p79
      %s82 = sadd.s32 %s81, 1
      %p85 = scmp.eq.s32.totalorder %s12, 1
      %p86 = scmp.ne.s32.totalorder %s81, %s83
      %p87 = scmp.eq.s32.totalorder %s12, 0
      %p88 = por %p86, %p87
      %p89 = scmp.ne.s32.totalorder %s81, %s83
      %p90 = scmp.eq.s32.totalorder %s17, 1
      %p91 = por %p89, %p90
      %p92 = scmp.ne.s32.totalorder %s83, %s84
      %p93 = scmp.eq.s32.totalorder %s17, 0
      %p94 = por %p92, %p93
      %p95 = scmp.ne.s32.totalorder %s83, %s84
      %p96 = scmp.eq.s32.totalorder %s18, 1
      %p97 = por %p95, %p96
      %p99 = scmp.ne.s32.totalorder %s84, %s98
      %p100 = scmp.eq.s32.totalorder %s18, 0
      %p101 = por %p99, %p100
      %s102 = ssub.s32 %s19, %s31
      %s103 = ssub.s32 %s20, %s27
      %s104 = sor.u32 %s102, %s103
      %p105 = scmp.eq.s32.totalorder %s104, 0
      %s107 = sadd.s32 %s106, 1
      %s108 = scalar_select %p105, %s106, %s107
      %p111 = pneg %p105
      %p112 = scmp.eq.s32.totalorder %s12, 1
      %p113 = por %p111, %p112
      %p114 = scmp.ne.s32.totalorder %s106, %s109
      %p115 = scmp.eq.s32.totalorder %s12, 0
      %p116 = por %p114, %p115
      %p117 = scmp.ne.s32.totalorder %s106, %s109
      %p118 = scmp.eq.s32.totalorder %s17, 1
      %p119 = por %p117, %p118
      %p120 = scmp.ne.s32.totalorder %s109, %s110
      %p121 = scmp.eq.s32.totalorder %s17, 0
      %p122 = por %p120, %p121
      %p123 = scmp.ne.s32.totalorder %s109, %s110
      %p124 = scmp.eq.s32.totalorder %s18, 1
      %p125 = por %p123, %p124
      %p127 = scmp.ne.s32.totalorder %s110, %s126
      %p128 = scmp.eq.s32.totalorder %s18, 0
      %p129 = por %p127, %p128
      %p130 = scmp.le.s32.totalorder 1, %s12
      %p131 = scmp.lt.s32.totalorder %s12, 3
      %p132 = pnand %p130, %p131
      %p133 = pneg %p132
      // Predicated region
      $region9: #{tpu_custom_call.1} parent=5 // pred_check
        _
      $region10: #{tpu_custom_call.1} parent=5 // pred_check_branch
        %135 = sbr.rel (%p132) target = $region12
      $region11: #{tpu_custom_call.1} parent=5 // pred_region
        %s136 = ssub.s32 %s12, 1
        // Predicated region
        $region13: #{tpu_custom_call.1} parent=11 // pred_check
          %p137 = pneg %p73
        $region14: #{tpu_custom_call.1} parent=11 // pred_check_branch
          %139 = sbr.rel (%p137) target = $region16
        $region15: #{tpu_custom_call.1} parent=11 // pred_region
          _
        $region16: #{tpu_custom_call.1} parent=11 // pred_fallthru
          _
        // Predicated region
        $region17: #{tpu_custom_call.1} parent=11 // pred_check
          %p140 = pneg %p94
        $region18: #{tpu_custom_call.1} parent=11 // pred_check_branch
          %142 = sbr.rel (%p140) target = $region20
        $region19: #{tpu_custom_call.1} parent=11 // pred_region
          _
        $region20: #{tpu_custom_call.1} parent=11 // pred_fallthru
          _
      $region12: #{tpu_custom_call.1} parent=5 // pred_fallthru
        _
      %p143 = scmp.lt.s32.totalorder %s12, 2
      // Predicated region
      $region21: #{tpu_custom_call.1} parent=5 // pred_check
        %p144 = pneg %p143
      $region22: #{tpu_custom_call.1} parent=5 // pred_check_branch
        %146 = sbr.rel (%p144) target = $region24
      $region23: #{tpu_custom_call.1} parent=5 // pred_region
        // Predicated region
        $region25: #{tpu_custom_call.1} parent=23 // pred_check
          %p147 = pneg %p46
        $region26: #{tpu_custom_call.1} parent=23 // pred_check_branch
          %149 = sbr.rel (%p147) target = $region28
        $region27: #{tpu_custom_call.1} parent=23 // pred_region
          %s150 = smul.u32 2, %s20
          %p151 = scmp.lt.s32.totalorder %s19, 1
          %s152 = scalar_select %p151, %s19, 1
          %p153 = scmp.lt.s32.totalorder %s150, 1
          %s154 = scalar_select %p153, %s150, 1
          %s155 = smul.addr %s152, 2
          %s156 = sadd.s32 %s154, %s155
          %s157 = smul.addr %s156, 4
          %s158 = scalar_lea.vmem %s0, %s157
          %s159 = smul.u32 2, %s20
        $region28: #{tpu_custom_call.1} parent=23 // pred_fallthru
          _
      $region24: #{tpu_custom_call.1} parent=5 // pred_fallthru
        _
      %p160 = scmp.le.s32.totalorder 1, %s12
      %p161 = scmp.lt.s32.totalorder %s12, 3
      %p162 = pnand %p160, %p161
      %p163 = pneg %p162
      // Predicated region
      $region29: #{tpu_custom_call.1} parent=5 // pred_check
        _
      $region30: #{tpu_custom_call.1} parent=5 // pred_check_branch
        %165 = sbr.rel (%p162) target = $region32
      $region31: #{tpu_custom_call.1} parent=5 // pred_region
        %s166 = ssub.s32 %s12, 1
        %s167 = smul.u32 2, %s22
        %p168 = scmp.lt.s32.totalorder %s21, 1
        %s169 = scalar_select %p168, %s21, 1
        %p170 = scmp.lt.s32.totalorder %s167, 1
        %s171 = scalar_select %p170, %s167, 1
        %s172 = smul.addr %s169, 2
        %s173 = sadd.s32 %s171, %s172
        %s174 = smul.addr %s173, 4
        %s175 = scalar_lea.vmem %s0, %s174
        %p176 = pneg %p52
        %p177 = pneg %p49
        %p178 = pneg %p73
        %p179 = pneg %p70
        %p180 = pneg %p94
        %p181 = pneg %p91
        %p182 = pneg %p122
        %p183 = pneg %p119
        %s184 = sand.u32 %s109, 1
        %s185 = scalar_lea.sflag [#allocation3], %s184
        %s186 = sand.u32 %s109, 1
        %s187 = smul.addr %s186, 16
        %s188 = scalar_lea.vmem [#allocation2], %s187
        %s189 = smul.u32 2, %s22
        %p190 = scmp.lt.s32.totalorder %s21, 1
        %s191 = scalar_select %p190, %s21, 1
        %p192 = scmp.lt.s32.totalorder %s189, 1
        %s193 = scalar_select %p192, %s189, 1
        %s194 = smul.addr %s191, 2
        %s195 = sadd.s32 %s193, %s194
        %s196 = smul.addr %s195, 4
        %s197 = scalar_lea.vmem %s0, %s196
        %s198 = smul.u32 2, %s22
        %s199 = smul.u32 2, %s22
        %v200 = vld [vmem:[%s197] sm:$0xff]
        %v201 = vld [vmem:[%s1] sm:$0xff]
        %203 = vset.pattern.permute.xlu0 0
        %204 = vperm.xlu0 %203, %v201
        %v205 = vpop.permute.xlu0 %204
        %v208 = vperm.slane %v200, 0
        %v209 = vperm.slane %v200, 4
        %v212 = vperm.slane %v208, 0
        %v213 = vperm.slane %v209, 0
        %v214 = vmul.f32 %v205, %v212
        %v215 = vmul.f32 %v205, %v213
        %216 = vset.pattern.permute.xlu0 1
        %217 = vperm.xlu0 %216, %v201
        %v218 = vpop.permute.xlu0 %217
        %v220 = vperm.slane %v200, 1
        %v221 = vperm.slane %v200, 5
        %v224 = vperm.slane %v220, 1
        %v225 = vperm.slane %v221, 1
        %v226 = vmul.f32 %v218, %v224
        %v227 = vmul.f32 %v218, %v225
        %v228 = vadd.f32 %v214, %v226
        %v229 = vadd.f32 %v215, %v227
        %230 = vset.pattern.permute.xlu0 2
        %231 = vperm.xlu0 %230, %v201
        %v232 = vpop.permute.xlu0 %231
        %v234 = vperm.slane %v200, 2
        %v235 = vperm.slane %v200, 6
        %v238 = vperm.slane %v234, 2
        %v239 = vperm.slane %v235, 2
        %v240 = vmul.f32 %v232, %v238
        %v241 = vmul.f32 %v232, %v239
        %v242 = vadd.f32 %v228, %v240
        %v243 = vadd.f32 %v229, %v241
        %244 = vset.pattern.permute.xlu0 3
        %245 = vperm.xlu0 %244, %v201
        %v246 = vpop.permute.xlu0 %245
        %v248 = vperm.slane %v200, 3
        %v249 = vperm.slane %v200, 7
        %v252 = vperm.slane %v248, 3
        %v253 = vperm.slane %v249, 3
        %v254 = vmul.f32 %v246, %v252
        %v255 = vmul.f32 %v246, %v253
        %v256 = vadd.f32 %v242, %v254
        %v257 = vadd.f32 %v243, %v255
        %v258 = vld [vmem:[%s2] sm:$0xff]
        %260 = vset.pattern.permute.xlu0 0
        %261 = vperm.xlu0 %260, %v258
        %v262 = vpop.permute.xlu0 %261
        %v264 = vadd.f32 %v256, %v262
        %v265 = vadd.f32 %v257, %v262
        %vm266 = vcmp.ge.f32.partialorder %v264, 0.0
        %vm267 = vcmp.ge.f32.partialorder %v265, 0.0
        %v268 = vmul.f32 %v264, 0.01
        %v269 = vmul.f32 %v265, 0.01
        %v270 = vsel %vm266, %v264, %v268
        %v271 = vsel %vm267, %v265, %v269
        %272 = vst [vmem:[%s188] sm:$0xff] %v270
        %273 = vst [vmem:[%s188 + $0x8] sm:$0xff] %v271
        %s274 = sand.u32 %s109, 1
        %s275 = scalar_lea.sflag [#allocation3], %s274
        %s276 = sand.u32 %s109, 1
        %s277 = smul.addr %s276, 16
        %s278 = scalar_lea.vmem [#allocation2], %s277
        // Predicated region
        $region33: #{tpu_custom_call.1} parent=31 // pred_check
          %p279 = pneg %p119
        $region34: #{tpu_custom_call.1} parent=31 // pred_check_branch
          %281 = sbr.rel (%p279) target = $region36
        $region35: #{tpu_custom_call.1} parent=31 // pred_region
          %s282 = smul.u32 2, %s22
          %284 = vsyncadd %s275, 0
          %s285 = smul.addr %s21, 2
          %s286 = sadd.s32 %s282, %s285
          %s287 = smul.addr %s286, 8
          %s288 = scalar_lea.hbm %s3, %s287
          %s290 = sshll.u32 %s278, 4
          %s291 = int_to_ptr.vmem [resolvable:$true] %s290
          %s292 = sshll.u32 %s288, 4
          %s293 = int_to_ptr.hbm [resolvable:$true] %s292
          %295 = dma.vmem_to_hbm [thread:$0]  %s291, 256, %s293, %s275
        $region36: #{tpu_custom_call.1} parent=31 // pred_fallthru
          _
      $region32: #{tpu_custom_call.1} parent=5 // pred_fallthru
        _
      %p296 = scmp.le.s32.totalorder 2, %s12
      // Predicated region
      $region37: #{tpu_custom_call.1} parent=5 // pred_check
        %p297 = pneg %p296
      $region38: #{tpu_custom_call.1} parent=5 // pred_check_branch
        %299 = sbr.rel (%p297) target = $region40
      $region39: #{tpu_custom_call.1} parent=5 // pred_region
        %s300 = ssub.s32 %s12, 2
        // Predicated region
        $region41: #{tpu_custom_call.1} parent=39 // pred_check
          %p301 = pneg %p125
        $region42: #{tpu_custom_call.1} parent=39 // pred_check_branch
          %303 = sbr.rel (%p301) target = $region44
        $region43: #{tpu_custom_call.1} parent=39 // pred_region
          %s304 = sand.u32 %s110, 1
          %s305 = scalar_lea.sflag [#allocation3], %s304
          %s306 = sand.u32 %s110, 1
          %s307 = smul.addr %s306, 16
          %s308 = scalar_lea.vmem [#allocation2], %s307
          %310 = dma.done %s305, 256
        $region44: #{tpu_custom_call.1} parent=39 // pred_fallthru
          _
      $region40: #{tpu_custom_call.1} parent=5 // pred_fallthru
        _
    $region6: #{tpu_custom_call.1} parent=1 // loop_footer
      %s16 = sadd.s32 1, %s12
    $region7: #{tpu_custom_call.1} parent=1 // loop_footer_branch
      %11 = sbr.rel target = $region3
    $region8: #{tpu_custom_call.1} parent=1 // loop_exit
      _
    %311 = vsyncpa [#allocation3], 1
    %s312 = scalar_lea.sflag [#allocation3], 1
    %313 = vsyncpa %s312, 1

</llo_original>
